<compile_context>
chip_gen: v6e
topology: v6e:2x2x1
jax: 0.10.0
libtpu: 0.0.40
codegen_flags: <defaults>
</compile_context>

<pallas_src>
import functools

import jax
import jax.numpy as jnp
from jax.experimental import pallas as pl
from jax.experimental.pallas import tpu as pltpu


_TARGET_BLOCK_F32_BYTES = 4 << 20   # ~4 MiB f32 working set per input block
_LANE_COLS = 512                    # lane-dense width for the flattened 'none' path


# ---------------------------------------------------------------------------
# Small static helpers
# ---------------------------------------------------------------------------
def _ceil_div(a, b):
    return -(-a // b)


def _round_up(a, b):
    return _ceil_div(a, b) * b


def _sublane(itemsize):
    return 8 if itemsize >= 4 else (16 if itemsize == 2 else 32)


def _pick_tile_r(rows, row_len, itemsize):
    """Sublane-aligned row-tile for a (rows, row_len) slab.

    Targets ~_TARGET_BLOCK_F32_BYTES of f32 working set per block and, when the
    row count allows it, guarantees >=2 grid steps so v7x's second TensorCore
    is never idle.  A partial last block is allowed (the kernels mask it)."""
    sub = _sublane(itemsize)
    if rows < 2 * sub:
        return rows                       # single full-extent block (always legal)
    cap = (_TARGET_BLOCK_F32_BYTES // (row_len * 4)) // sub * sub
    cap = max(sub, cap)
    half = _round_up(_ceil_div(rows, 2), sub)   # >=2 grid steps
    return min(cap, half)


def _compiler_params(tile_r, row_len, itemsize):
    block_in = tile_r * row_len * itemsize
    block_f32 = tile_r * row_len * 4
    # 2 inputs x 2 pipeline buffers (deeper buffering buys nothing on a DMA-bound
    # reduction) + ~6 live full-tile f32 temporaries + headroom.  Capped at
    # 48 MiB so it fits v7x's 64 MiB physical VMEM/TC; v5e/v6e (128 MiB) could
    # admit larger tiles, but ~4 MiB blocks already sit at ~86% of the HBM
    # roofline, so the extra VMEM buys little on this mem-bound kernel.
    need = 4 * block_in + 6 * block_f32 + (4 << 20)
    return pltpu.CompilerParams(
        dimension_semantics=("parallel",),
        vmem_limit_bytes=int(min(max(need, 32 << 20), 48 << 20)))


# ---------------------------------------------------------------------------
# Kernels
# ---------------------------------------------------------------------------
def _none_kernel(s_ref, t_ref, out_ref, *, divergence, rows, tile_r):
    # s_ref / t_ref: (tile_r, cols) lane-dense slab of the flattened preds[0].
    s = s_ref[...].astype(jnp.float32)
    t = t_ref[...].astype(jnp.float32)
    if divergence == "kl":
        # PyTorch KLDivLoss(sum) on (log(s), t): sum( t * (log t - log s) ).
        # The where() guard makes t == 0 contribute exactly 0 (also covers the
        # masked / padded region of a partial last block).
        pos = t > 0.0
        safe_t = jnp.where(pos, t, 1.0)
        val = jnp.where(pos, t * (jnp.log(safe_t) - jnp.log(s)), 0.0)
    else:  # 'mse'
        d = s - t
        val = d * d
    if rows % tile_r:  # partial last block -> mask rows past the true extent
        row0 = pl.program_id(0) * tile_r
        rid = row0 + jax.lax.broadcasted_iota(jnp.int32, val.shape, 0)
        val = jnp.where(rid < rows, val, 0.0)
    out_ref[0, 0] = jnp.sum(val)


def _channel_kernel(s_ref, t_ref, out_ref, *, divergence, inv_temperature,
                    rows, tile_r):
    # s_ref / t_ref: (tile_r, hw) block of the (n*c, hw) map; each row is an
    # independent spatial softmax, so tiling over rows is exact.
    # TODO(synk): for extreme hw where even an 8-row block overflows VMEM
    # (notably v7x's 64 MiB), an online flash-style spatial softmax is required.
    s = s_ref[...].astype(jnp.float32) * inv_temperature
    t = t_ref[...].astype(jnp.float32) * inv_temperature

    t_sh = t - jnp.max(t, axis=-1, keepdims=True)
    t_exp = jnp.exp(t_sh)
    t_sum = jnp.sum(t_exp, axis=-1, keepdims=True)

    s_sh = s - jnp.max(s, axis=-1, keepdims=True)
    s_exp = jnp.exp(s_sh)
    s_sum = jnp.sum(s_exp, axis=-1, keepdims=True)

    if divergence == "kl":
        # KL(p_t || p_s) per row, algebraically reduced (sum_j p_t = 1):
        #   sum_j p_t*(log p_t - log p_s)
        #     = sum_j t_exp*(t_sh - s_sh) / t_sum + log(s_sum) - log(t_sum)
        # The only division is exact on a (tile_r, 1) column; no full-tile
        # p_t / log_p_t / log_p_s temporaries, no 0*log(0) NaN.
        num = jnp.sum(t_exp * (t_sh - s_sh), axis=-1, keepdims=True)
        row_val = num / t_sum + (jnp.log(s_sum) - jnp.log(t_sum))
    else:  # 'mse' between the spatially-normalised maps (exact per-row divide)
        p_t = t_exp * (1.0 / t_sum)
        p_s = s_exp * (1.0 / s_sum)
        d = p_s - p_t
        row_val = jnp.sum(d * d, axis=-1, keepdims=True)

    if rows % tile_r:  # partial last block -> mask rows past the true extent
        row0 = pl.program_id(0) * tile_r
        rid = row0 + jax.lax.broadcasted_iota(jnp.int32, row_val.shape, 0)
        row_val = jnp.where(rid < rows, row_val, 0.0)
    out_ref[0, 0] = jnp.sum(row_val)


def _partial_sums(kernel, s2d, t2d, tile_r):
    rows, cols = s2d.shape
    num_tiles = pl.cdiv(rows, tile_r)
    itemsize = jnp.dtype(s2d.dtype).itemsize
    partials = pl.pallas_call(
        kernel,
        out_shape=jax.ShapeDtypeStruct((num_tiles, 1), jnp.float32),
        grid=(num_tiles,),
        in_specs=[pl.BlockSpec((tile_r, cols), lambda i: (i, 0)),
                  pl.BlockSpec((tile_r, cols), lambda i: (i, 0))],
        out_specs=pl.BlockSpec((1, 1), lambda i: (i, 0),
                               memory_space=pltpu.SMEM),
        compiler_params=_compiler_params(tile_r, cols, itemsize),
    )(s2d, t2d)
    return jnp.sum(partials)


# ---------------------------------------------------------------------------
# Public entry point
# ---------------------------------------------------------------------------
def criterion_cwd(preds_s, preds_t, norm_type="none", divergence="kl",
                  temperature=4.0):
    """Pallas implementation of CriterionCWD.forward (forward pass only).

    Pass bf16 inputs only if the producer already emits bf16 (halves HBM traffic
    on this bandwidth-bound kernel); a wrapper-side f32->bf16 cast would add
    traffic and regress.  Kernels upcast to f32 internally.
    """
    n, c, h, w = preds_s.shape
    hw = h * w
    # Module: temperature stays 1.0 unless divergence == 'kl'.
    temp = float(temperature) if divergence == "kl" else 1.0
    itemsize = jnp.dtype(preds_s.dtype).itemsize

    if norm_type == "none":
        # Module uses only sample 0 but divides by n*h*w.
        scale = (temp ** 2) / float(n * h * w)
        s_flat = preds_s[0].reshape(-1)
        t_flat = preds_t[0].reshape(-1)
        total_elems = c * hw

        # Lane-dense (rows, k*128) layout; elementwise reduction is layout-free.
        cols = total_elems if total_elems < 128 else min(
            _LANE_COLS, (total_elems // 128) * 128)
        main_rows = total_elems // cols
        main = main_rows * cols
        s_main = s_flat[:main].reshape(main_rows, cols)
        t_main = t_flat[:main].reshape(main_rows, cols)

        tile_r = _pick_tile_r(main_rows, cols, itemsize)
        kernel = functools.partial(_none_kernel, divergence=divergence,
                                   rows=main_rows, tile_r=tile_r)
        total = _partial_sums(kernel, s_main, t_main, tile_r)

        tail = total_elems - main
        if tail:  # < cols leftover elements: negligible, summed in plain JAX
            s_t = s_flat[main:].astype(jnp.float32)
            t_t = t_flat[main:].astype(jnp.float32)
            if divergence == "kl":
                pos = t_t > 0.0
                safe_t = jnp.where(pos, t_t, 1.0)
                tail_val = jnp.where(
                    pos, t_t * (jnp.log(safe_t) - jnp.log(s_t)), 0.0)
            else:
                tail_val = (s_t - t_t) ** 2
            total = total + jnp.sum(tail_val)
        return total * scale

    elif norm_type == "channel":
        # Collapse (n, c) into one row axis: bigger 8-aligned tiles, more grid
        # steps, simpler BlockSpecs.  Each row's spatial softmax stays intact.
        rows = n * c
        s2 = preds_s.reshape(rows, hw)
        t2 = preds_t.reshape(rows, hw)
        scale = (temp ** 2) / float(n * c)
        tile_r = _pick_tile_r(rows, hw, itemsize)
        kernel = functools.partial(_channel_kernel, divergence=divergence,
                                   inv_temperature=1.0 / temp,
                                   rows=rows, tile_r=tile_r)
        return _partial_sums(kernel, s2, t2, tile_r) * scale

    else:
        # TODO(synk): 'spatial' and 'channel_mean' norm types not implemented.
        raise NotImplementedError(norm_type)


# ---------------------------------------------------------------------------
# Pure-JAX reference of the PyTorch forward pass (for verification)
# ---------------------------------------------------------------------------
def _ref_criterion(preds_s, preds_t, norm_type="none", divergence="kl",
                   temperature=4.0):
    n, c, h, w = preds_s.shape
    temp = float(temperature) if divergence == "kl" else 1.0
    if norm_type == "none":
        norm_s = preds_s[0].astype(jnp.float32)
        norm_t = preds_t[0].astype(jnp.float32)
    elif norm_type == "channel":
        norm_s = jax.nn.softmax(
            (preds_s.astype(jnp.float32) / temp).reshape(n, c, -1), axis=-1)
        norm_t = jax.nn.softmax(
            (preds_t.astype(jnp.float32) / temp).reshape(n, c, -1), axis=-1)
    else:
        raise NotImplementedError(norm_type)
    if divergence == "kl":
        pos = norm_t > 0.0
        safe_t = jnp.where(pos, norm_t, 1.0)
        loss = jnp.sum(jnp.where(
            pos, norm_t * (jnp.log(safe_t) - jnp.log(norm_s)), 0.0))
    else:
        loss = jnp.sum((norm_s - norm_t) ** 2)
    if norm_type in ("channel", "channel_mean"):
        loss = loss / (n * c)
    else:
        loss = loss / (n * h * w)
    return loss * temp ** 2


if __name__ == "__main__":
    key = jax.random.PRNGKey(0)
    k1, k2 = jax.random.split(key)
    n, c, h, w = 2, 4, 16, 16

    # Raw feature maps (channel-norm path accepts arbitrary real features).
    feat_s = jax.random.normal(k1, (n, c, h, w), dtype=jnp.float32)
    feat_t = jax.random.normal(k2, (n, c, h, w), dtype=jnp.float32)

    # Strictly-positive probability-like maps for the norm_type='none' KL path
    # (the module takes log(preds_S[0]) directly there).
    prob_s = jax.nn.softmax(feat_s.reshape(n, c, -1), axis=-1).reshape(n, c, h, w)
    prob_t = jax.nn.softmax(feat_t.reshape(n, c, -1), axis=-1).reshape(n, c, h, w)

    def check(name, got, want, rtol, atol):
        assert jnp.allclose(got, want, rtol=rtol, atol=atol), (name, got, want)

    # Module defaults: norm_type='none', divergence='kl', temperature=4.0.
    got = jax.block_until_ready(criterion_cwd(prob_s, prob_t))
    check("none/kl", got, _ref_criterion(prob_s, prob_t), 1e-3, 1e-6)

    # norm_type='none', divergence='mse'.
    got = jax.block_until_ready(criterion_cwd(prob_s, prob_t, divergence="mse"))
    check("none/mse", got, _ref_criterion(prob_s, prob_t, divergence="mse"),
          1e-3, 1e-8)

    # Canonical channel-wise distillation config (exact normalisation now).
    got = jax.block_until_ready(
        criterion_cwd(feat_s, feat_t, norm_type="channel", divergence="kl"))
    check("channel/kl", got,
          _ref_criterion(feat_s, feat_t, norm_type="channel", divergence="kl"),
          1e-3, 1e-6)

    # Channel norm with MSE divergence.
    got = jax.block_until_ready(
        criterion_cwd(feat_s, feat_t, norm_type="channel", divergence="mse"))
    check("channel/mse", got,
          _ref_criterion(feat_s, feat_t, norm_type="channel", divergence="mse"),
          1e-3, 1e-8)

    print("KERNEL_OK")
</pallas_src>

<mosaic_0001>
module attributes {stable_mosaic.version = 11 : i64} {
  func.func @_none_kernel(%arg0: i32, %arg1: memref<2x512xf32, #tpu.memory_space<vmem>>, %arg2: memref<2x512xf32, #tpu.memory_space<vmem>>, %arg3: memref<1x1xf32, #tpu.memory_space<smem>>) attributes {dimension_semantics = [#tpu.dimension_semantics<parallel>], iteration_bounds = array<i64: 1>, scalar_prefetch = 0 : i64, scratch_operands = 0 : i64, tpu.core_type = #tpu.core_type<tc>, window_params = [{transform_indices = @transform_0, window_bounds = array<i64: 2, 512>}, {transform_indices = @transform_1, window_bounds = array<i64: 2, 512>}, {transform_indices = @transform_2, window_bounds = array<i64: 1, 1>}]} {
    %c0 = arith.constant 0 : index
    %c0_0 = arith.constant 0 : index
    %0 = vector.load %arg1[%c0, %c0_0] : memref<2x512xf32, #tpu.memory_space<vmem>>, vector<2x512xf32>
    %c0_1 = arith.constant 0 : index
    %c0_2 = arith.constant 0 : index
    %1 = vector.load %arg2[%c0_1, %c0_2] : memref<2x512xf32, #tpu.memory_space<vmem>>, vector<2x512xf32>
    %cst = arith.constant 0.000000e+00 : f32
    %2 = vector.broadcast %cst : f32 to vector<2x512xf32>
    %3 = arith.cmpf ogt, %1, %2 : vector<2x512xf32>
    %cst_3 = arith.constant 1.000000e+00 : f32
    %4 = vector.broadcast %cst_3 : f32 to vector<2x512xf32>
    %5 = arith.select %3, %1, %4 : vector<2x512xi1>, vector<2x512xf32>
    %6 = math.log %5 : vector<2x512xf32>
    %7 = math.log %0 : vector<2x512xf32>
    %8 = arith.subf %6, %7 : vector<2x512xf32>
    %9 = arith.mulf %1, %8 : vector<2x512xf32>
    %cst_4 = arith.constant 0.000000e+00 : f32
    %10 = vector.broadcast %cst_4 : f32 to vector<2x512xf32>
    %11 = arith.select %3, %9, %10 : vector<2x512xi1>, vector<2x512xf32>
    %12 = vector.shape_cast %11 : vector<2x512xf32> to vector<1x2x512xf32>
    %cst_5 = arith.constant dense<0.000000e+00> : vector<1xf32>
    %13 = vector.multi_reduction <add>, %12, %cst_5 [1, 2] : vector<1x2x512xf32> to vector<1xf32>
    %14 = vector.shape_cast %13 : vector<1xf32> to vector<1x1x1xf32>
    %15 = vector.extract %14[0, 0, 0] : f32 from vector<1x1x1xf32>
    %c0_6 = arith.constant 0 : index
    %c0_7 = arith.constant 0 : index
    %16 = memref.load %arg3[%c0_6, %c0_7] : memref<1x1xf32, #tpu.memory_space<smem>>
    memref.store %15, %arg3[%c0_6, %c0_7] : memref<1x1xf32, #tpu.memory_space<smem>>
    return
  }
  func.func @transform_0(%arg0: i32) -> (i32, i32) {
    %c0_i32 = arith.constant 0 : i32
    %c0_i32_0 = arith.constant 0 : i32
    return %arg0, %c0_i32 : i32, i32
  }
  func.func @transform_1(%arg0: i32) -> (i32, i32) {
    %c0_i32 = arith.constant 0 : i32
    %c0_i32_0 = arith.constant 0 : i32
    return %arg0, %c0_i32 : i32, i32
  }
  func.func @transform_2(%arg0: i32) -> (i32, i32) {
    %c0_i32 = arith.constant 0 : i32
    %c0_i32_0 = arith.constant 0 : i32
    return %arg0, %c0_i32 : i32, i32
  }
}

</mosaic_0001>

<llo_original>
// kernel: tpu_custom_call.1
$region0: #{tpu_custom_call.1}
  #allocation0 [shape = 'u32[]', space=smem, size = 0x4, offset = 0x4, fixed_abs, tag = 'smem constant byte address 0x4 - core index']
  #allocation1 [shape = 'u32[144,128]{1,0:T(1,128)}', space=vmem, size = 0x12000, scoped, tag = 'internal scratch']
  %s0 = inlined_call_operand.hbm [shape: f32[2,512], index: 0, kind: input, shape index: {}]
  %s1 = inlined_call_operand.hbm [shape: f32[2,512], index: 1, kind: input, shape index: {}]
  %s2 = inlined_call_operand.hbm [shape: f32[1,1], index: 2, kind: output, shape index: {}]
  %s3 = sld [smem:[#allocation0]]
  $region26: #{tpu_custom_call.1} parent=0
    _
  %s5 = ssub.s32 1, %s3
  %s6 = scalar_select 0, %s5, %s3
  $region1: #{tpu_custom_call.1} parent=0
    #allocation2 [shape = 'u8[4096]{0}', space=vmem, size = 0x1000, scoped, tag = 'input window, operand 0, single buffered']
    #allocation3 [shape = 's32[1]{0}', space=sflag, size = 0x4, scoped, tag = 'scoped memory for tpu_custom_call.1']
    #allocation4 [shape = 's32[1]{0}', space=sflag, size = 0x4, scoped, tag = 'scoped memory for tpu_custom_call.1']
    #allocation5 [shape = 'u8[4096]{0}', space=vmem, size = 0x1000, scoped, tag = 'input window, operand 1, single buffered']
    #allocation6 [shape = 's32[1]{0}', space=sflag, size = 0x4, scoped, tag = 'scoped memory for tpu_custom_call.1']
    #allocation7 [shape = 'u8[512]{0}', space=smem, size = 0x200, scoped, tag = 'output window, operand 0, single buffered']
    %7 = vsyncpa [#allocation3], 0
    %8 = vsyncpa [#allocation6], 0
    %9 = vsyncpa [#allocation4], 0
    // Predicated region
    $region2: #{tpu_custom_call.1} parent=1 // pred_check
      _
    $region3: #{tpu_custom_call.1} parent=1 // pred_check_branch
      %11 = sbr.rel (0) target = $region5
    $region4: #{tpu_custom_call.1} parent=1 // pred_region
      %s13 = ssub.s32 128, 128
      %14 = vsyncadd [#allocation3], %s13
      %s16 = sshll.u32 [#allocation2], 4
      %s17 = int_to_ptr.vmem [resolvable:$true] %s16
      %19 = dma.hbm_to_vmem [thread:$0]  %s0, 128, %s17, [#allocation3]
    $region5: #{tpu_custom_call.1} parent=1 // pred_fallthru
      _
    // Predicated region
    $region6: #{tpu_custom_call.1} parent=1 // pred_check
      _
    $region7: #{tpu_custom_call.1} parent=1 // pred_check_branch
      %21 = sbr.rel (0) target = $region9
    $region8: #{tpu_custom_call.1} parent=1 // pred_region
      %s23 = ssub.s32 128, 128
      %24 = vsyncadd [#allocation6], %s23
      %s26 = sshll.u32 [#allocation5], 4
      %s27 = int_to_ptr.vmem [resolvable:$true] %s26
      %29 = dma.hbm_to_vmem [thread:$0]  %s1, 128, %s27, [#allocation6]
    $region9: #{tpu_custom_call.1} parent=1 // pred_fallthru
      _
    // Predicated region
    $region10: #{tpu_custom_call.1} parent=1 // pred_check
      _
    $region11: #{tpu_custom_call.1} parent=1 // pred_check_branch
      %31 = sbr.rel (0) target = $region13
    $region12: #{tpu_custom_call.1} parent=1 // pred_region
      %32 = dma.done [#allocation3], 128
    $region13: #{tpu_custom_call.1} parent=1 // pred_fallthru
      _
    // Predicated region
    $region14: #{tpu_custom_call.1} parent=1 // pred_check
      _
    $region15: #{tpu_custom_call.1} parent=1 // pred_check_branch
      %34 = sbr.rel (0) target = $region17
    $region16: #{tpu_custom_call.1} parent=1 // pred_region
      %35 = dma.done [#allocation6], 128
    $region17: #{tpu_custom_call.1} parent=1 // pred_fallthru
      _
    %v36 = vld [vmem:[#allocation2] sm:$0xff]
    %v37 = vld [vmem:[#allocation5] sm:$0xff]
    %vm38 = vcmp.gt.f32.partialorder %v37, 0.0
    %v39 = vsel %vm38, %v37, 1.0
    %v40 = vlog2.pop %v39
    %v41 = vmul.f32 %v40, 0.6931472
    %v42 = vlog2.pop %v36
    %v43 = vmul.f32 %v42, 0.6931472
    %v44 = vsub.f32 %v41, %v43
    %v45 = vmul.f32 %v37, %v44
    %v46 = vsel %vm38, %v45, 0.0
    %v48 = vcombine.high %v46, %v46
    %v50 = vunpack.c.l.s4 1983009808
    %v51 = vunpack.c.0.s8 %v50
    %v52 = vlaneseq
    %v53 = vshrl.u32 %v52, 7
    %v54 = vsub.s32 %v51, %v53
    %v55 = vrot.slane %v46, %v54
    %v57 = vunpack.c.l.s4 1983009808
    %v58 = vunpack.c.0.s8 %v57
    %v59 = vlaneseq
    %v60 = vshrl.u32 %v59, 7
    %v61 = vsub.s32 %v58, %v60
    %v62 = vrot.slane %v48, %v61
    %v63 = vcombine.high %v55, %v55
    %v64 = vcombine.high %v62, %v62
    %vm69 = vcmask 1041408
    %v70 = vsel %vm69, %v55, 0.0
    %v71 = vsel %vm69, %v63, 0.0
    %v72 = vadd.f32 %v70, %v71
    %v73 = vsel %vm69, %v62, 0.0
    %v74 = vadd.f32 %v72, %v73
    %v75 = vsel %vm69, %v64, 0.0
    %v76 = vadd.f32 %v74, %v75
    %77 = vadd.xlane.f32.xlu0 %v76
    %v78 = vpop.xlane.xlu0 %77
    %v79 = vrot.slane %v78, 4
    %v80 = vadd.f32 %v78, %v79
    %v81 = vrot.slane %v80, 2
    %v82 = vadd.f32 %v80, %v81
    %v83 = vrot.slane %v82, 1
    %v84 = vadd.f32 %v82, %v83
    %s85 = vtos %v84
    %s86 = scalar_lea.smem [#allocation7], 0
    %87 = sst [smem:[%s86]] %s85
    // Predicated region
    $region18: #{tpu_custom_call.1} parent=1 // pred_check
      _
    $region19: #{tpu_custom_call.1} parent=1 // pred_check_branch
      %89 = sbr.rel (0) target = $region21
    $region20: #{tpu_custom_call.1} parent=1 // pred_region
      %s91 = ssub.s32 16, 16
      %92 = vsyncadd [#allocation4], %s91
      %95 = dma.smem_to_hbm [#allocation7], 16, %s2, [#allocation4]
    $region21: #{tpu_custom_call.1} parent=1 // pred_fallthru
      _
    // Predicated region
    $region22: #{tpu_custom_call.1} parent=1 // pred_check
      _
    $region23: #{tpu_custom_call.1} parent=1 // pred_check_branch
      %97 = sbr.rel (0) target = $region25
    $region24: #{tpu_custom_call.1} parent=1 // pred_region
      %98 = dma.done [#allocation4], 16
    $region25: #{tpu_custom_call.1} parent=1 // pred_fallthru
      _
    %99 = sfence
    %100 = vsyncpa [#allocation3], 1
    %101 = vsyncpa [#allocation6], 1
    %102 = vsyncpa [#allocation4], 1

</llo_original>
